<compile_context>
chip_gen: v7x
topology: tpu7x:2x2x1
jax: 0.10.0
libtpu: 0.0.40
codegen_flags: <defaults>
</compile_context>

<pallas_src>
import functools

import jax
import jax.numpy as jnp
from jax.experimental import pallas as pl
from jax.experimental.pallas import tpu as pltpu

_NEG_MASK = -1.0e30                       # additive mask; valid positions always exist
_VMEM_LIMIT_BYTES = 48 * 1024 * 1024      # < v7x's 64 MiB physical, << v5e/v6e's 128 MiB
_VMEM_TILE_BUDGET = 16 * 1024 * 1024      # sizing target; also fits v5e's tight default


def _fused_conv_relu_maxpool_kernel(x_ref, w_ref, tbl_ref, o_ref, *, max_w, c_pad):
    """Fused conv(all windows) + bias + valid-mask + max-over-time + ReLU.

    x_ref:   (B_tile, S, D)        f32 embeddings (cast to bf16 in VMEM)
    w_ref:   (D, max_w * c_pad)    bf16 fused weights (tap-major C blocks)
    tbl_ref: (S, c_pad)            f32 fused additive bias / -1e30 mask table
    o_ref:   (B_tile, c_pad)       f32 pooled features (lane-dense)
    """
    bt, s_len, d = x_ref.shape
    m = bt * s_len

    # One big MXU matmul: collapse (B_tile, S) into the M dimension.  Reshape
    # before the cast so the sublane merge is a pure re-tiling when S % 8 == 0.
    xm = x_ref[...].reshape(m, d).astype(jnp.bfloat16)
    y = jnp.dot(xm, w_ref[...], preferred_element_type=jnp.float32)   # (M, max_w*c_pad)

    # Shifted adds over the per-tap C blocks, done in flat (batch*time) space
    # with XLU sublane rolls (idle unit here) instead of zero-pad concatenates.
    # Rows that wrap around or leak across batch-row boundaries only land at
    # time positions t >= S - s, which is >= T_h for every channel whose tap s
    # is non-zero, so the -1e30 mask below keeps them from reaching the max;
    # zero-weight (padded) taps contribute exactly 0 either way.
    z = y[:, 0:c_pad]
    for s in range(1, max_w):
        tap = y[:, s * c_pad:(s + 1) * c_pad]                         # lane-aligned slice
        z = z + pltpu.roll(tap, shift=m - s, axis=0)                  # result[r] = tap[r+s]

    # Fused bias + per-channel valid-length mask (precomputed on the host),
    # then max over time and ReLU (ReLU is monotone => relu(max) == max(relu)).
    z3 = z.reshape(bt, s_len, c_pad) + tbl_ref[...][None, :, :]
    o_ref[...] = jnp.maximum(jnp.max(z3, axis=1), 0.0)


def _choose_batch_tile(B, S, D, n_total, c_pad):
    """Batch tile: big enough to feed the MXU M dimension, small enough to fit
    the per-step VMEM working set on every TPU generation."""
    per_row = (2 * S * D * 4        # f32 x tile, double-buffered
               + S * D * 2          # bf16 cast copy
               + S * n_total * 4    # f32 matmul result (all taps)
               + S * c_pad * 4      # f32 accumulated z
               + 2 * c_pad * 4)     # f32 pooled output rows, double-buffered
    b_vmem = max(1, _VMEM_TILE_BUDGET // per_row)
    b_mxu = max(8, pl.cdiv(2048, S))          # target M = b_tile * S ~ 2048
    b_tile = min(B, b_vmem, b_mxu)
    if b_tile < B:
        b_tile = max((b_tile // 8) * 8, 8)    # sublane-aligned partial tiles
        b_tile = min(b_tile, B)               # degenerate tiny-B case -> full batch
    elif B >= 16 and (B // 2) * S >= 512:
        # v7x megacore: prefer >= 2 grid steps so both TensorCores get work,
        # as long as each half still gives the MXU a reasonable M.
        b_tile = max(8, ((((B + 1) // 2) + 7) // 8) * 8)
    # TODO(synk): for very long sequences an S grid axis with a (max_w-1) halo
    # would bound VMEM without shrinking the batch tile; not needed for
    # sentence-CNN sequence lengths.
    return b_tile


def _fused_conv_relu_maxpool(x_bsd, w2, table, *, max_w, c_pad):
    """x_bsd: (B, S, D) f32; w2: (D, max_w*c_pad) bf16; table: (S, c_pad) f32."""
    B, S, D = x_bsd.shape
    n_total = max_w * c_pad
    b_tile = _choose_batch_tile(B, S, D, n_total, c_pad)
    grid = (pl.cdiv(B, b_tile),)

    kernel = functools.partial(
        _fused_conv_relu_maxpool_kernel, max_w=max_w, c_pad=c_pad)

    cost = pl.CostEstimate(
        flops=2 * B * S * D * n_total,
        transcendentals=0,
        bytes_accessed=(B * S * D * 4            # x (f32, single pass)
                        + D * n_total * 2        # fused weights (bf16)
                        + S * c_pad * 4          # bias/mask table
                        + B * c_pad * 4))        # output (f32)

    return pl.pallas_call(
        kernel,
        out_shape=jax.ShapeDtypeStruct((B, c_pad), jnp.float32),
        grid_spec=pltpu.PrefetchScalarGridSpec(
            num_scalar_prefetch=0,
            grid=grid,
            in_specs=[
                pl.BlockSpec((b_tile, S, D), lambda i: (i, 0, 0)),
                pl.BlockSpec((D, n_total), lambda i: (0, 0)),
                pl.BlockSpec((S, c_pad), lambda i: (0, 0)),
            ],
            out_specs=pl.BlockSpec((b_tile, c_pad), lambda i: (i, 0)),
        ),
        compiler_params=pltpu.CompilerParams(
            dimension_semantics=("parallel",),
            vmem_limit_bytes=_VMEM_LIMIT_BYTES),
        cost_estimate=cost,
    )(x_bsd, w2, table)


class Convolution:
    """JAX/Pallas port of the PyTorch sentence-CNN `Convolution` module."""

    def __init__(self, dimension, window, channel, dropout_rate, key):
        self.window = tuple(window)
        self.channel = tuple(channel)
        self.dimension = dimension
        self.dropout_rate = dropout_rate
        self.max_w = max(self.window)
        self.c_total = sum(self.channel)
        self.c_pad = max(128, ((self.c_total + 127) // 128) * 128)

        # Per-head params kept in PyTorch layout for the reference check.
        self.head_weights = []
        self.head_biases = []

        # Fused parameters.  D (the matmul K dim) is intentionally NOT padded
        # to 128: zero-padding x in HBM would multiply x traffic for this
        # x-read-bound kernel, and padded K rows add no useful MXU work.
        w2 = jnp.zeros((dimension, self.max_w * self.c_pad), jnp.float32)
        bias = jnp.zeros((1, self.c_pad), jnp.float32)
        win_per_chan = jnp.ones((1, self.c_pad), jnp.int32)

        off = 0
        for size, num in zip(self.window, self.channel):
            key, sub = jax.random.split(key)
            # kaiming_normal_(mode='fan_out', relu): std = sqrt(2 / (num*size*dim))
            fan_out = num * size * dimension
            std = (2.0 / fan_out) ** 0.5
            w_head = std * jax.random.normal(
                sub, (num, 1, size, dimension), jnp.float32)   # PyTorch layout
            b_head = jnp.zeros((num,), jnp.float32)            # zeros_ init
            self.head_weights.append(w_head)
            self.head_biases.append(b_head)

            for s in range(size):
                col0 = s * self.c_pad + off
                w2 = w2.at[:, col0:col0 + num].set(w_head[:, 0, s, :].T)  # (D, num)
            bias = bias.at[0, off:off + num].set(b_head)
            win_per_chan = win_per_chan.at[0, off:off + num].set(size)
            off += num

        self.w2 = w2.astype(jnp.bfloat16)
        self.bias = bias
        self.win_per_chan = win_per_chan

    def __call__(self, embedded_words):
        # embedded_words: NCHW = (B, 1, S, D), matching the PyTorch module.
        B, _, S, D = embedded_words.shape
        assert S >= self.max_w, "seq_len must be >= max(window)"
        assert D == self.dimension
        x = embedded_words[:, 0, :, :].astype(jnp.float32)   # f32 into the kernel (no
                                                             # standalone bf16 cast pass)
        # Fused additive bias / valid-length mask table: bias where t < T_h,
        # -1e30 otherwise (T_h = S - w_h + 1 per channel).  Tiny host-side op.
        thr = (S + 1 - self.win_per_chan).astype(jnp.int32)             # (1, c_pad)
        t_idx = jnp.arange(S, dtype=jnp.int32)[:, None]                 # (S, 1)
        table = jnp.where(t_idx < thr, self.bias, jnp.float32(_NEG_MASK))  # (S, c_pad)

        out_pad = _fused_conv_relu_maxpool(
            x, self.w2, table, max_w=self.max_w, c_pad=self.c_pad)
        # TODO(synk): dropout omitted (inference identity; the PyTorch forward's
        # `self.dropout` attribute does not even exist — it is `self.dropout_rate`).
        return out_pad[:, :self.c_total]                                 # (B, sum(C))


def _reference_forward(model, embedded_words):
    """Pure-JAX f32 reference matching the PyTorch forward."""
    x = embedded_words[:, 0, :, :].astype(jnp.float32)                   # (B, S, D)
    B, S, D = x.shape
    feats = []
    for size, w_head, b_head in zip(model.window, model.head_weights,
                                    model.head_biases):
        T = S - size + 1
        cols = []
        for t in range(T):
            patch = x[:, t:t + size, :]                                  # (B, size, D)
            cols.append(jnp.einsum('bsd,csd->bc', patch, w_head[:, 0, :, :]))
        conv = jnp.stack(cols, axis=-1) + b_head[None, :, None]          # (B, C, T)
        feats.append(jnp.max(jnp.maximum(conv, 0.0), axis=-1))           # ReLU + max-over-time
    return jnp.concatenate(feats, axis=1)


if __name__ == "__main__":
    key = jax.random.PRNGKey(0)
    k_param, k_input = jax.random.split(key)

    batch, seq_len, dimension = 2, 8, 32
    window = (2, 3, 4)
    channel = (4, 5, 6)

    model = Convolution(dimension, window, channel, dropout_rate=0.5, key=k_param)

    # NCHW input as in PyTorch: (B, 1, S, D)
    x = jax.random.normal(k_input, (batch, 1, seq_len, dimension), jnp.float32)

    out = jax.block_until_ready(model(x))
    assert out.shape == (batch, sum(channel)), out.shape

    ref = _reference_forward(model, x)
    max_err = float(jnp.max(jnp.abs(out - ref)))
    assert bool(jnp.allclose(out, ref, atol=5e-2, rtol=5e-2)), max_err

    print("KERNEL_OK")
</pallas_src>

<mosaic_0001>
module attributes {stable_mosaic.version = 11 : i64} {
  func.func @_fused_conv_relu_maxpool_kernel(%arg0: i32, %arg1: memref<2x8x32xf32, #tpu.memory_space<vmem>>, %arg2: memref<32x512xbf16, #tpu.memory_space<vmem>>, %arg3: memref<8x128xf32, #tpu.memory_space<vmem>>, %arg4: memref<2x128xf32, #tpu.memory_space<vmem>>) attributes {dimension_semantics = [#tpu.dimension_semantics<parallel>], iteration_bounds = array<i64: 1>, scalar_prefetch = 0 : i64, scratch_operands = 0 : i64, tpu.core_type = #tpu.core_type<tc>, window_params = [{transform_indices = @transform_0, window_bounds = array<i64: 2, 8, 32>}, {pipeline_mode = #tpu.pipeline_mode<synchronous>, transform_indices = @transform_1, window_bounds = array<i64: 32, 512>}, {pipeline_mode = #tpu.pipeline_mode<synchronous>, transform_indices = @transform_2, window_bounds = array<i64: 8, 128>}, {transform_indices = @transform_3, window_bounds = array<i64: 2, 128>}]} {
    %c0 = arith.constant 0 : index
    %c0_0 = arith.constant 0 : index
    %c0_1 = arith.constant 0 : index
    %0 = vector.load %arg1[%c0, %c0_0, %c0_1] : memref<2x8x32xf32, #tpu.memory_space<vmem>>, vector<2x8x32xf32>
    %1 = vector.shape_cast %0 : vector<2x8x32xf32> to vector<16x32xf32>
    %2 = arith.truncf %1 : vector<16x32xf32> to vector<16x32xbf16>
    %c0_2 = arith.constant 0 : index
    %c0_3 = arith.constant 0 : index
    %3 = vector.load %arg2[%c0_2, %c0_3] : memref<32x512xbf16, #tpu.memory_space<vmem>>, vector<32x512xbf16>
    %cst = arith.constant dense<0.000000e+00> : vector<16x512xf32>
    %4 = tpu.matmul %2, %3, %cst {dimension_numbers = #tpu.dot_dimension_numbers<[1], [0], [0], [1], [0, 0, 1, 1], [], []>} : vector<16x32xbf16>, vector<32x512xbf16>, vector<16x512xf32> -> vector<16x512xf32>
    %5 = vector.extract_strided_slice %4 {offsets = [0, 0], sizes = [16, 128], strides = [1, 1]} : vector<16x512xf32> to vector<16x128xf32>
    %6 = vector.extract_strided_slice %4 {offsets = [0, 128], sizes = [16, 128], strides = [1, 1]} : vector<16x512xf32> to vector<16x128xf32>
    %c15_i32 = arith.constant 15 : i32
    %7 = tpu.dynamic_rotate %6 by %c15_i32 dim 0 : vector<16x128xf32>, i32 -> vector<16x128xf32>
    %8 = arith.addf %5, %7 : vector<16x128xf32>
    %9 = vector.extract_strided_slice %4 {offsets = [0, 256], sizes = [16, 128], strides = [1, 1]} : vector<16x512xf32> to vector<16x128xf32>
    %c14_i32 = arith.constant 14 : i32
    %10 = tpu.dynamic_rotate %9 by %c14_i32 dim 0 : vector<16x128xf32>, i32 -> vector<16x128xf32>
    %11 = arith.addf %8, %10 : vector<16x128xf32>
    %12 = vector.extract_strided_slice %4 {offsets = [0, 384], sizes = [16, 128], strides = [1, 1]} : vector<16x512xf32> to vector<16x128xf32>
    %c13_i32 = arith.constant 13 : i32
    %13 = tpu.dynamic_rotate %12 by %c13_i32 dim 0 : vector<16x128xf32>, i32 -> vector<16x128xf32>
    %14 = arith.addf %11, %13 : vector<16x128xf32>
    %15 = vector.shape_cast %14 : vector<16x128xf32> to vector<2x8x128xf32>
    %c0_4 = arith.constant 0 : index
    %c0_5 = arith.constant 0 : index
    %16 = vector.load %arg3[%c0_4, %c0_5] : memref<8x128xf32, #tpu.memory_space<vmem>>, vector<8x128xf32>
    %17 = vector.shape_cast %16 : vector<8x128xf32> to vector<1x8x128xf32>
    %18 = vector.broadcast %17 : vector<1x8x128xf32> to vector<2x8x128xf32>
    %19 = arith.addf %15, %18 : vector<2x8x128xf32>
    %cst_6 = arith.constant dense<0xFF800000> : vector<2x128xf32>
    %20 = vector.multi_reduction <maximumf>, %19, %cst_6 [1] : vector<2x8x128xf32> to vector<2x128xf32>
    %cst_7 = arith.constant 0.000000e+00 : f32
    %21 = vector.broadcast %cst_7 : f32 to vector<2x128xf32>
    %22 = arith.maximumf %20, %21 : vector<2x128xf32>
    %c0_8 = arith.constant 0 : index
    %c0_9 = arith.constant 0 : index
    %23 = vector.load %arg4[%c0_8, %c0_9] : memref<2x128xf32, #tpu.memory_space<vmem>>, vector<2x128xf32>
    tpu.vector_store %arg4[%c0_8, %c0_9], %22 {strides = array<i32>} : memref<2x128xf32, #tpu.memory_space<vmem>>, vector<2x128xf32>,
    return
  }
  func.func @transform_0(%arg0: i32) -> (i32, i32, i32) {
    %c0_i32 = arith.constant 0 : i32
    %c0_i32_0 = arith.constant 0 : i32
    %c0_i32_1 = arith.constant 0 : i32
    return %arg0, %c0_i32, %c0_i32_0 : i32, i32, i32
  }
  func.func @transform_1(%arg0: i32) -> (i32, i32) {
    %c0_i32 = arith.constant 0 : i32
    %c0_i32_0 = arith.constant 0 : i32
    %c0_i32_1 = arith.constant 0 : i32
    return %c0_i32, %c0_i32_0 : i32, i32
  }
  func.func @transform_2(%arg0: i32) -> (i32, i32) {
    %c0_i32 = arith.constant 0 : i32
    %c0_i32_0 = arith.constant 0 : i32
    %c0_i32_1 = arith.constant 0 : i32
    return %c0_i32, %c0_i32_0 : i32, i32
  }
  func.func @transform_3(%arg0: i32) -> (i32, i32) {
    %c0_i32 = arith.constant 0 : i32
    %c0_i32_0 = arith.constant 0 : i32
    return %arg0, %c0_i32 : i32, i32
  }
}

</mosaic_0001>

<llo_original>
// kernel: tpu_custom_call.1
$region0: #{tpu_custom_call.1}
  #allocation0 [shape = 'u32[]', space=smem, size = 0x4, offset = 0x4, fixed_abs, tag = 'smem constant byte address 0x4 - core index']
  #allocation1 [shape = 'u32[144,128]{1,0:T(1,128)}', space=vmem, size = 0x12000, scoped, tag = 'internal scratch']
  %s0 = inlined_call_operand.hbm [shape: f32[2,8,32], index: 0, kind: input, shape index: {}]
  %s1 = inlined_call_operand.hbm [shape: bf16[32,512], index: 1, kind: input, shape index: {}]
  %s2 = inlined_call_operand.hbm [shape: f32[8,128], index: 2, kind: input, shape index: {}]
  %s3 = inlined_call_operand.hbm [shape: f32[2,128], index: 3, kind: output, shape index: {}]
  %s4 = sld [smem:[#allocation0]]
  $region34: #{tpu_custom_call.1} parent=0
    _
  %s6 = ssub.s32 1, %s4
  %s7 = scalar_select 0, %s6, %s4
  $region1: #{tpu_custom_call.1} parent=0
    #allocation2 [shape = 'u8[8192]{0}', space=vmem, size = 0x2000, scoped, tag = 'input window, operand 0, single buffered']
    #allocation3 [shape = 's32[1]{0}', space=sflag, size = 0x4, scoped, tag = 'scoped memory for tpu_custom_call.1']
    #allocation4 [shape = 's32[1]{0}', space=sflag, size = 0x4, scoped, tag = 'scoped memory for tpu_custom_call.1']
    #allocation5 [shape = 'u8[32768]{0}', space=vmem, size = 0x8000, scoped, tag = 'input window, operand 1, single buffered']
    #allocation6 [shape = 's32[1]{0}', space=sflag, size = 0x4, scoped, tag = 'scoped memory for tpu_custom_call.1']
    #allocation7 [shape = 'u8[4096]{0}', space=vmem, size = 0x1000, scoped, tag = 'input window, operand 2, single buffered']
    #allocation8 [shape = 'u8[1024]{0}', space=vmem, size = 0x400, scoped, tag = 'output window, operand 0, single buffered']
    %8 = vsyncpa [#allocation3], 0
    %9 = vsyncpa [#allocation6], 0
    %10 = vsyncpa [#allocation4], 0
    // Predicated region
    $region2: #{tpu_custom_call.1} parent=1 // pred_check
      _
    $region3: #{tpu_custom_call.1} parent=1 // pred_check_branch
      %12 = sbr.rel (0) target = $region5
    $region4: #{tpu_custom_call.1} parent=1 // pred_region
      %s14 = ssub.s32 256, 256
      %15 = vsyncadd [#allocation3], %s14
      %s16 = sshll.u32 [#allocation2], 4
      %s17 = int_to_ptr.vmem [resolvable:$true] %s16
      %22 = dma.hbm_to_vmem [thread:$0]  %s0, 256, %s17, [#allocation3], 128, 128, 8
    $region5: #{tpu_custom_call.1} parent=1 // pred_fallthru
      _
    // Predicated region
    $region6: #{tpu_custom_call.1} parent=1 // pred_check
      _
    $region7: #{tpu_custom_call.1} parent=1 // pred_check_branch
      %24 = sbr.rel (0) target = $region9
    $region8: #{tpu_custom_call.1} parent=1 // pred_region
      %s26 = ssub.s32 1024, 1024
      %27 = vsyncadd [#allocation6], %s26
      %s28 = sshll.u32 [#allocation5], 4
      %s29 = int_to_ptr.vmem [resolvable:$true] %s28
      %34 = dma.hbm_to_vmem [thread:$0]  %s1, 1024, %s29, [#allocation6], 256, 256, 16
    $region9: #{tpu_custom_call.1} parent=1 // pred_fallthru
      _
    // Predicated region
    $region10: #{tpu_custom_call.1} parent=1 // pred_check
      _
    $region11: #{tpu_custom_call.1} parent=1 // pred_check_branch
      %36 = sbr.rel (0) target = $region13
    $region12: #{tpu_custom_call.1} parent=1 // pred_region
      %s38 = ssub.s32 128, 128
      %39 = vsyncadd [#allocation6], %s38
      %s41 = sshll.u32 [#allocation7], 4
      %s42 = int_to_ptr.vmem [resolvable:$true] %s41
      %44 = dma.hbm_to_vmem [thread:$0]  %s2, 128, %s42, [#allocation6]
    $region13: #{tpu_custom_call.1} parent=1 // pred_fallthru
      _
    // Predicated region
    $region14: #{tpu_custom_call.1} parent=1 // pred_check
      _
    $region15: #{tpu_custom_call.1} parent=1 // pred_check_branch
      %46 = sbr.rel (0) target = $region17
    $region16: #{tpu_custom_call.1} parent=1 // pred_region
      %47 = dma.done [#allocation3], 256
    $region17: #{tpu_custom_call.1} parent=1 // pred_fallthru
      _
    // Predicated region
    $region18: #{tpu_custom_call.1} parent=1 // pred_check
      _
    $region19: #{tpu_custom_call.1} parent=1 // pred_check_branch
      %49 = sbr.rel (0) target = $region21
    $region20: #{tpu_custom_call.1} parent=1 // pred_region
      %50 = dma.done [#allocation6], 1024
    $region21: #{tpu_custom_call.1} parent=1 // pred_fallthru
      _
    // Predicated region
    $region22: #{tpu_custom_call.1} parent=1 // pred_check
      _
    $region23: #{tpu_custom_call.1} parent=1 // pred_check_branch
      %52 = sbr.rel (0) target = $region25
    $region24: #{tpu_custom_call.1} parent=1 // pred_region
      %53 = dma.done [#allocation6], 128
    $region25: #{tpu_custom_call.1} parent=1 // pred_fallthru
      _
    %v55 = vld [vmem:[#allocation2] sm:$0xff]
    %v56 = vld [vmem:[#allocation2 + $0x8] sm:$0xff]
    %v57 = vpack.c.bf16 %v56, %v55
    %v58 = vld [vmem:[#allocation5] sm:$0xff]
    %v59 = vld [vmem:[#allocation5 + $0x8] sm:$0xff]
    %v60 = vld [vmem:[#allocation5 + $0x10] sm:$0xff]
    %v61 = vld [vmem:[#allocation5 + $0x18] sm:$0xff]
    %v62 = vld [vmem:[#allocation5 + $0x20] sm:$0xff]
    %v63 = vld [vmem:[#allocation5 + $0x28] sm:$0xff]
    %v64 = vld [vmem:[#allocation5 + $0x30] sm:$0xff]
    %v65 = vld [vmem:[#allocation5 + $0x38] sm:$0xff]
    %v74 = vunpack.c.l.b16 %v58
    %v75 = vunpack.c.h.b16 %v58
    %v76 = vunpack.c.l.b16 %v59
    %v77 = vunpack.c.h.b16 %v59
    %v78 = vunpack.c.l.b16 %v60
    %v79 = vunpack.c.h.b16 %v60
    %v80 = vunpack.c.l.b16 %v61
    %v81 = vunpack.c.h.b16 %v61
    %v82 = vunpack.c.l.b16 %v62
    %v83 = vunpack.c.h.b16 %v62
    %v84 = vunpack.c.l.b16 %v63
    %v85 = vunpack.c.h.b16 %v63
    %v86 = vunpack.c.l.b16 %v64
    %v87 = vunpack.c.h.b16 %v64
    %v88 = vunpack.c.l.b16 %v65
    %v89 = vunpack.c.h.b16 %v65
    %v90 = vpack.c.b16 %v78, %v74
    %v91 = vpack.c.b16 %v79, %v75
    %v92 = vpack.c.b16 %v80, %v76
    %v93 = vpack.c.b16 %v81, %v77
    %v94 = vpack.c.b16 %v86, %v82
    %v95 = vpack.c.b16 %v87, %v83
    %v96 = vpack.c.b16 %v88, %v84
    %v97 = vpack.c.b16 %v89, %v85
    %vm106 = vcmask 261120
    %v108 = vsel %vm106, %v57, 0
    %110 = vmatprep.subr.bf16.mxu0 %v91
    %111 = vmatpush1.bf16.msra.mxu0 %v90
    %112 = vmatprep.subr.bf16.mxu0 %v95
    %113 = vmatpush1.bf16.msra.mxu0 %v94
    %114 = vmatprep.subr.bf16.mxu0 0
    %115 = vmatpush1.bf16.msra.mxu0 0
    %116 = vmatprep.subr.bf16.mxu0 0
    %117 = vmatpush1.bf16.msra.mxu0 0
    %118 = vmatprep.subr.bf16.mxu0 0
    %119 = vmatpush1.bf16.msra.mxu0 0
    %120 = vmatprep.subr.bf16.mxu0 0
    %121 = vmatpush1.bf16.msra.mxu0 0
    %122 = vmatprep.subr.bf16.mxu0 0
    %123 = vmatpush1.bf16.msra.mxu0 0
    %124 = vmatprep.subr.bf16.mxu0 0
    %125 = vmatpush1.bf16.msra.mxu0 0
    %126 = vmatprep.subr.bf16.mxu0 0
    %127 = vmatpush1.bf16.msra.mxu0 0
    %128 = vmatprep.subr.bf16.mxu0 0
    %129 = vmatpush1.bf16.msra.mxu0 0
    %130 = vmatprep.subr.bf16.mxu0 0
    %131 = vmatpush1.bf16.msra.mxu0 0
    %132 = vmatprep.subr.bf16.mxu0 0
    %133 = vmatpush1.bf16.msra.mxu0 0
    %134 = vmatprep.subr.bf16.mxu0 0
    %135 = vmatpush1.bf16.msra.mxu0 0
    %136 = vmatprep.subr.bf16.mxu0 0
    %137 = vmatpush1.bf16.msra.mxu0 0
    %138 = vmatprep.subr.bf16.mxu0 0
    %139 = vmatpush1.bf16.msra.mxu0 0
    %140 = vmatprep.subr.bf16.mxu0 0
    %141 = vmatpush1.bf16.msra.mxu0 0
    %142 = vmatprep.mubr.bf16.mxu0 0
    %143 = vmatmul.mubr.bf16.gmra.mrb[0].mxu0 %v108
    %v144 = vpop.f32.mrb[0].mxu0
    %v145 = vadd.f32 0.0, %v144
    %v146 = vpop.f32.mrb[0].mxu0
    %v147 = vadd.f32 0.0, %v146
    %v148 = vpop.f32.mrb[0].mxu0
    %v149 = vadd.f32 0.0, %v148
    %v150 = vpop.f32.mrb[0].mxu0
    %v151 = vadd.f32 0.0, %v150
    %152 = vdwg.mxu0
    %153 = vmatprep.subr.bf16.mxu0 %v93
    %154 = vmatpush1.bf16.msra.mxu0 %v92
    %155 = vmatprep.subr.bf16.mxu0 %v97
    %156 = vmatpush1.bf16.msra.mxu0 %v96
    %157 = vmatprep.subr.bf16.mxu0 0
    %158 = vmatpush1.bf16.msra.mxu0 0
    %159 = vmatprep.subr.bf16.mxu0 0
    %160 = vmatpush1.bf16.msra.mxu0 0
    %161 = vmatprep.subr.bf16.mxu0 0
    %162 = vmatpush1.bf16.msra.mxu0 0
    %163 = vmatprep.subr.bf16.mxu0 0
    %164 = vmatpush1.bf16.msra.mxu0 0
    %165 = vmatprep.subr.bf16.mxu0 0
    %166 = vmatpush1.bf16.msra.mxu0 0
    %167 = vmatprep.subr.bf16.mxu0 0
    %168 = vmatpush1.bf16.msra.mxu0 0
    %169 = vmatprep.subr.bf16.mxu0 0
    %170 = vmatpush1.bf16.msra.mxu0 0
    %171 = vmatprep.subr.bf16.mxu0 0
    %172 = vmatpush1.bf16.msra.mxu0 0
    %173 = vmatprep.subr.bf16.mxu0 0
    %174 = vmatpush1.bf16.msra.mxu0 0
    %175 = vmatprep.subr.bf16.mxu0 0
    %176 = vmatpush1.bf16.msra.mxu0 0
    %177 = vmatprep.subr.bf16.mxu0 0
    %178 = vmatpush1.bf16.msra.mxu0 0
    %179 = vmatprep.subr.bf16.mxu0 0
    %180 = vmatpush1.bf16.msra.mxu0 0
    %181 = vmatprep.subr.bf16.mxu0 0
    %182 = vmatpush1.bf16.msra.mxu0 0
    %183 = vmatprep.subr.bf16.mxu0 0
    %184 = vmatpush1.bf16.msra.mxu0 0
    %185 = vmatprep.mubr.bf16.mxu0 0
    %186 = vmatmul.mubr.bf16.gmra.mrb[0].mxu0 %v108
    %v187 = vpop.f32.mrb[0].mxu0
    %v188 = vadd.f32 0.0, %v187
    %v189 = vpop.f32.mrb[0].mxu0
    %v190 = vadd.f32 0.0, %v189
    %v191 = vpop.f32.mrb[0].mxu0
    %v192 = vadd.f32 0.0, %v191
    %v193 = vpop.f32.mrb[0].mxu0
    %v194 = vadd.f32 0.0, %v193
    %195 = vdwg.mxu0
    %v196 = vrot.slane %v147, 1
    %v197 = vrot.slane %v151, 1
    %v198 = vlaneseq
    %v199 = vshrl.u32 %v198, 7
    %vm200 = vcmp.lt.s32.totalorder %v199, 7
    %v201 = vsel %vm200, %v196, %v197
    %v202 = vsel %vm200, %v197, %v196
    %v203 = vadd.f32 %v145, %v201
    %v204 = vadd.f32 %v149, %v202
    %v205 = vrot.slane %v188, 2
    %v206 = vrot.slane %v192, 2
    %vm207 = vcmp.lt.s32.totalorder %v199, 6
    %v208 = vsel %vm207, %v205, %v206
    %v209 = vsel %vm207, %v206, %v205
    %v210 = vadd.f32 %v203, %v208
    %v211 = vadd.f32 %v204, %v209
    %v212 = vrot.slane %v190, 3
    %v213 = vrot.slane %v194, 3
    %vm214 = vcmp.lt.s32.totalorder %v199, 5
    %v215 = vsel %vm214, %v212, %v213
    %v216 = vsel %vm214, %v213, %v212
    %v217 = vadd.f32 %v210, %v215
    %v218 = vadd.f32 %v211, %v216
    %v219 = vld [vmem:[#allocation7] sm:$0xff]
    %v220 = vadd.f32 %v217, %v219
    %v221 = vadd.f32 %v218, %v219
    %v222 = vrot.slane %v220, 4
    %v223 = vmax.f32 %v220, %v222
    %v224 = vrot.slane %v223, 2
    %v225 = vmax.f32 %v223, %v224
    %v226 = vrot.slane %v225, 1
    %v227 = vmax.f32 %v225, %v226
    %v228 = vrot.slane %v221, 4
    %v229 = vmax.f32 %v221, %v228
    %v230 = vrot.slane %v229, 2
    %v231 = vmax.f32 %v229, %v230
    %v232 = vrot.slane %v231, 1
    %v233 = vmax.f32 %v231, %v232
    %v234 = vmax.f32 %v227, 0.0
    %v235 = vmax.f32 %v233, 0.0
    %vm238 = vcmask 1041409
    %v239 = vsel %vm238, %v235, %v234
    %241 = vst [vmem:[#allocation8] sm:$0x3] %v239
    // Predicated region
    $region26: #{tpu_custom_call.1} parent=1 // pred_check
      _
    $region27: #{tpu_custom_call.1} parent=1 // pred_check_branch
      %243 = sbr.rel (0) target = $region29
    $region28: #{tpu_custom_call.1} parent=1 // pred_region
      %s245 = ssub.s32 32, 32
      %246 = vsyncadd [#allocation4], %s245
      %s248 = sshll.u32 [#allocation8], 4
      %s249 = int_to_ptr.vmem [resolvable:$true] %s248
      %251 = dma.vmem_to_hbm [thread:$0]  %s249, 32, %s3, [#allocation4]
    $region29: #{tpu_custom_call.1} parent=1 // pred_fallthru
      _
    // Predicated region
    $region30: #{tpu_custom_call.1} parent=1 // pred_check
      _
    $region31: #{tpu_custom_call.1} parent=1 // pred_check_branch
      %253 = sbr.rel (0) target = $region33
    $region32: #{tpu_custom_call.1} parent=1 // pred_region
      %254 = dma.done [#allocation4], 32
    $region33: #{tpu_custom_call.1} parent=1 // pred_fallthru
      _
    %255 = vsyncpa [#allocation3], 1
    %256 = vsyncpa [#allocation6], 1
    %257 = vsyncpa [#allocation4], 1

</llo_original>
